<compile_context>
chip_gen: v6e
topology: v6e:2x2x1
jax: 0.10.0
libtpu: 0.0.40
codegen_flags: <defaults>
</compile_context>

<pallas_src>
import functools

import numpy as np
import jax
import jax.numpy as jnp
from jax.experimental import pallas as pl
from jax.experimental.pallas import tpu as pltpu

LANE = 128          # lane tile width; every channel axis is zero-padded to this
OFF = 64            # lane offset of the 2nd SEB packed into the same tile
EPS = 1e-5          # InstanceNorm eps (PyTorch default)
KS = (3, 5, 7)      # the three RiR kernel sizes fused into one block kernel

# vector-slab row layout (rows 0..48 hold the depthwise taps in dy*k+dx order)
R_B1, R_G1, R_A1 = 49, 50, 51
R_DB, R_G2, R_A2 = 52, 53, 54
R_B3, R_G3, R_A3 = 55, 56, 57
R_S1B, R_S2B = 58, 59
VROWS = 64

_CP = pltpu.CompilerParams(dimension_semantics=("parallel",),
                           vmem_limit_bytes=48 * 1024 * 1024)


# ----------------------------- in-kernel helpers ----------------------------------------------

def _gelu(v):
    # TODO(synk): PyTorch nn.GELU() is the exact erf-GELU; tanh approximation is used here for a
    # guaranteed Mosaic lowering (|difference| ~1e-3).
    c = 0.7978845608028654
    return 0.5 * v * (1.0 + jnp.tanh(c * (v + 0.044715 * v * v * v)))


def _inorm(v, g, b):
    # InstanceNorm over the rows of a (HW, C) tile (training-mode stats, biased var) + affine.
    mu = jnp.mean(v, axis=0, keepdims=True)
    var = jnp.mean(jnp.square(v - mu), axis=0, keepdims=True)
    return (v - mu) * jax.lax.rsqrt(var + EPS) * g + b


def _rollup(x, s):
    # out[r] = x[(r + s) % N] along the sublane (flattened spatial) axis; XLU, not MXU.
    n = x.shape[0]
    s = s % n
    if s == 0:
        return x
    return pltpu.roll(x, n - s, axis=0)


def _dw_reflect(x, vrow, k, col, row, hdim, wdim):
    """Depthwise kxk conv with reflect padding on a flattened (HW, LANE) tile.

    Column shifts are sublane rolls by +-dx; reflect edges are fixed by masked selects that
    reuse the already-computed base rolls.  Row shifts are rolls by (dy-p)*W with analogous
    boundary corrections.  Per-lane weights live in vrow rows [0, k*k)."""
    p = (k - 1) // 2
    # --- column taps with reflect correction (all corrections reuse the k base rolls) ---
    base = {t: _rollup(x, t) for t in range(-p, p + 1)}
    ctap = {0: base[0]}
    for s in range(1, p + 1):
        v = base[s]
        for j in range(s):
            v = jnp.where(col == wdim - 1 - j, base[2 * j - s], v)
        ctap[s] = v
        v = base[-s]
        for j in range(s):
            v = jnp.where(col == j, base[s - 2 * j], v)
        ctap[-s] = v
    # --- per-dy weighted sum over dx, then row shift with reflect correction ---
    acc = None
    for dy in range(k):
        t = dy - p
        vs = None
        for dx in range(k):
            wrow = vrow[dy * k + dx:dy * k + dx + 1]          # (1, LANE) per-lane weight
            term = ctap[dx - p] * wrow
            vs = term if vs is None else vs + term
        r = _rollup(vs, t * wdim)
        for j in range(abs(t)):
            if t > 0:
                r = jnp.where(row == hdim - 1 - j, _rollup(vs, (2 * j - t) * wdim), r)
            else:
                r = jnp.where(row == j, _rollup(vs, (-t - 2 * j) * wdim), r)
        acc = r if acc is None else acc + r
    return acc


def _seb_side(xb, mats_ref, vecs_ref, bi, s, k, col, row, hdim, wdim):
    """One packed pair of SqueezeExcitationBottlenecks (lane offsets 0 / OFF) sharing input xb.

    xb is already bf16.  Output is fp32 (HW, LANE)."""
    v = vecs_ref[bi, s]                                   # (VROWS, LANE) fp32 slab
    w1 = mats_ref[bi, s, 0:LANE, :]                        # bf16 weight blocks
    w3 = mats_ref[bi, s, LANE:2 * LANE, :]
    s1w = mats_ref[bi, s, 2 * LANE:3 * LANE, :]
    s2w = mats_ref[bi, s, 3 * LANE:4 * LANE, :]

    # 1x1 conv + InstanceNorm + GELU
    u = jnp.dot(xb, w1, preferred_element_type=jnp.float32) + v[R_B1:R_B1 + 1]
    u = _gelu(_inorm(u, v[R_G1:R_G1 + 1], v[R_A1:R_A1 + 1]))
    # depthwise kxk reflect conv (rolls + masked reflect fixups) + InstanceNorm + GELU
    u = _dw_reflect(u, v, k, col, row, hdim, wdim) + v[R_DB:R_DB + 1]
    u = _gelu(_inorm(u, v[R_G2:R_G2 + 1], v[R_A2:R_A2 + 1]))
    # 1x1 conv + InstanceNorm
    y = jnp.dot(u.astype(jnp.bfloat16), w3, preferred_element_type=jnp.float32) + v[R_B3:R_B3 + 1]
    y = _inorm(y, v[R_G3:R_G3 + 1], v[R_A3:R_A3 + 1])
    # squeeze-excitation: global avg-pool -> 1x1 -> GELU -> 1x1 -> sigmoid -> scale
    m = jnp.mean(y, axis=0, keepdims=True)
    z = _gelu(jnp.dot(m.astype(jnp.bfloat16), s1w, preferred_element_type=jnp.float32)
              + v[R_S1B:R_S1B + 1])
    gate = jax.nn.sigmoid(jnp.dot(z.astype(jnp.bfloat16), s2w, preferred_element_type=jnp.float32)
                          + v[R_S2B:R_S2B + 1])
    return y * gate


def _block_kernel(xr_ref, xt_ref, mats_ref, vecs_ref, o_ref, *, hdim, wdim):
    """Fused BasicBlock body: 3 kernel-size branches x 4 SEBs each, summed in VMEM.

    Output lane layout:
      [0 : d)               sum_k residual_k + transient_across_k   (first d channels)
      [d + i*dd : d+(i+1)dd) branch i's dense-depth tail            (steered at packing time)
      [OFF : OFF + d)       sum_k residual_across_k + transient_k
    """
    hw = hdim * wdim
    ridx = jax.lax.broadcasted_iota(jnp.int32, (hw, 1), 0)
    col = ridx % wdim
    row = ridx // wdim
    xrb = xr_ref[0].astype(jnp.bfloat16)
    xtb = xt_ref[0].astype(jnp.bfloat16)
    acc = jnp.zeros((hw, LANE), jnp.float32)
    for bi, k in enumerate(KS):
        acc = acc + _seb_side(xrb, mats_ref, vecs_ref, bi, 0, k, col, row, hdim, wdim)
        acc = acc + _seb_side(xtb, mats_ref, vecs_ref, bi, 1, k, col, row, hdim, wdim)
    o_ref[...] = acc[None]


def _conv_in_kernel(x_ref, w_ref, v_ref, o_ref):
    # 1x1 conv (bf16 weights) + InstanceNorm(affine) -- used for the unify / shortcut branches.
    y = jnp.dot(x_ref[0].astype(jnp.bfloat16), w_ref[...],
                preferred_element_type=jnp.float32) + v_ref[0:1]
    o_ref[...] = _inorm(y, v_ref[1:2], v_ref[2:3])[None]


# ----------------------------- cached pallas_call builders ------------------------------------

@functools.lru_cache(maxsize=None)
def _block_call(n, hdim, wdim):
    hw = hdim * wdim
    assert hw % 8 == 0 and max((k - 1) // 2 for k in KS) < min(hdim, wdim)
    kern = functools.partial(_block_kernel, hdim=hdim, wdim=wdim)
    return jax.jit(pl.pallas_call(
        kern,
        out_shape=jax.ShapeDtypeStruct((n, hw, LANE), jnp.float32),
        grid=(n,),
        in_specs=[pl.BlockSpec((1, hw, LANE), lambda i: (i, 0, 0)),              # x_residual
                  pl.BlockSpec((1, hw, LANE), lambda i: (i, 0, 0)),              # x_transient
                  pl.BlockSpec((len(KS), 2, 4 * LANE, LANE), lambda i: (0, 0, 0, 0)),  # matrices
                  pl.BlockSpec((len(KS), 2, VROWS, LANE), lambda i: (0, 0, 0, 0))],    # vectors
        out_specs=pl.BlockSpec((1, hw, LANE), lambda i: (i, 0, 0)),
        compiler_params=_CP))


@functools.lru_cache(maxsize=None)
def _conv_in_call(n, hw):
    return jax.jit(pl.pallas_call(
        _conv_in_kernel,
        out_shape=jax.ShapeDtypeStruct((n, hw, LANE), jnp.float32),
        grid=(n,),
        in_specs=[pl.BlockSpec((1, hw, LANE), lambda i: (i, 0, 0)),
                  pl.BlockSpec((LANE, LANE), lambda i: (0, 0)),
                  pl.BlockSpec((8, LANE), lambda i: (0, 0))],
        out_specs=pl.BlockSpec((1, hw, LANE), lambda i: (i, 0, 0)),
        compiler_params=_CP))


# ----------------------------- parameter init & packing ---------------------------------------

def _nrm(rng, shape, scale):
    return (scale * rng.standard_normal(shape)).astype(np.float32)


def init_seb(rng, last_planes, in_planes, out_total, k):
    # raw (unpadded) parameters of one SqueezeExcitationBottleneck (IN gamma/beta are 1/0)
    return {
        'w1': _nrm(rng, (last_planes, in_planes), 0.1), 'b1': _nrm(rng, (in_planes,), 0.02),
        'dw': _nrm(rng, (k * k, in_planes), 0.1), 'db': _nrm(rng, (in_planes,), 0.02),
        'w3': _nrm(rng, (in_planes, out_total), 0.1), 'b3': _nrm(rng, (out_total,), 0.02),
        's1w': _nrm(rng, (out_total, in_planes), 0.1), 's1b': _nrm(rng, (in_planes,), 0.02),
        's2w': _nrm(rng, (in_planes, out_total), 0.1), 's2b': _nrm(rng, (out_total,), 0.02),
    }


def _pack_side_np(seb0, seb1, perm0, perm1, k):
    # pack two SEBs that share one input into a 128-lane tile; seb0's output channels are
    # scattered to lanes perm0 (dense-depth tail steered per branch), seb1's to lanes perm1.
    last, inp = seb0['w1'].shape
    RW1, RW3, RS1, RS2 = 0, LANE, 2 * LANE, 3 * LANE
    M = np.zeros((4 * LANE, LANE), np.float32)
    V = np.zeros((VROWS, LANE), np.float32)

    M[RW1:RW1 + last, 0:inp] = seb0['w1']
    M[RW1:RW1 + last, OFF:OFF + inp] = seb1['w1']
    M[RW3:RW3 + inp, perm0] = seb0['w3']
    M[RW3 + OFF:RW3 + OFF + inp, perm1] = seb1['w3']
    M[RS1 + perm0, 0:inp] = seb0['s1w']
    M[RS1 + perm1, OFF:OFF + inp] = seb1['s1w']
    M[RS2:RS2 + inp, perm0] = seb0['s2w']
    M[RS2 + OFF:RS2 + OFF + inp, perm1] = seb1['s2w']

    V[0:k * k, 0:inp] = seb0['dw']
    V[0:k * k, OFF:OFF + inp] = seb1['dw']
    V[R_B1, 0:inp] = seb0['b1'];   V[R_B1, OFF:OFF + inp] = seb1['b1']
    V[R_G1, 0:inp] = 1.0;          V[R_G1, OFF:OFF + inp] = 1.0
    V[R_DB, 0:inp] = seb0['db'];   V[R_DB, OFF:OFF + inp] = seb1['db']
    V[R_G2, 0:inp] = 1.0;          V[R_G2, OFF:OFF + inp] = 1.0
    V[R_B3, perm0] = seb0['b3'];   V[R_B3, perm1] = seb1['b3']
    V[R_G3, perm0] = 1.0;          V[R_G3, perm1] = 1.0
    V[R_S1B, 0:inp] = seb0['s1b']; V[R_S1B, OFF:OFF + inp] = seb1['s1b']
    V[R_S2B, perm0] = seb0['s2b']; V[R_S2B, perm1] = seb1['s2b']
    # beta rows (R_A1/R_A2/R_A3) stay zero (PyTorch affine bias init).
    return M, V


def _init_block_branch(rng, rir_in, in_planes, d, dd, k, idx):
    # One ResnetInit (4 SEBs) for kernel size k; branch idx steers its dense-depth tail to
    # output lanes [d + idx*dd, d + (idx+1)*dd) so the fused kernel can simply sum branches.
    residual = init_seb(rng, rir_in, in_planes, d + dd, k)
    transient = init_seb(rng, rir_in, in_planes, d, k)
    residual_across = init_seb(rng, rir_in, in_planes, d, k)
    transient_across = init_seb(rng, rir_in, in_planes, d + dd, k)
    perm_r = np.concatenate([np.arange(d), d + idx * dd + np.arange(dd)]).astype(np.int64)
    perm_t = (OFF + np.arange(d)).astype(np.int64)
    M0, V0 = _pack_side_np(residual, residual_across, perm_r, perm_t, k)      # consumes x_res
    M1, V1 = _pack_side_np(transient_across, transient, perm_r, perm_t, k)    # consumes x_tran
    return np.stack([M0, M1]), np.stack([V0, V1])


def init_conv1x1_in(rng, cin, cout):
    assert cin <= LANE and cout <= LANE
    w = np.zeros((LANE, LANE), np.float32)
    w[:cin, :cout] = _nrm(rng, (cin, cout), 0.1)
    bga = np.zeros((8, LANE), np.float32)
    bga[0, :cout] = _nrm(rng, (cout,), 0.02)
    bga[1, :cout] = 1.0
    return {'w': jnp.asarray(w, jnp.bfloat16), 'bga': jnp.asarray(bga), 'cout': cout}


def init_basic_block(rng, last_planes, in_planes, out_planes, dd, root, is_unify):
    p = {'last_planes': last_planes, 'out_planes': out_planes, 'dense_depth': dd,
         'root': root, 'is_unify': is_unify, 'unify': None, 'shortcut': None}
    if is_unify:
        p['unify'] = init_conv1x1_in(rng, last_planes, 2 * out_planes + dd)
        rir_in = out_planes + dd
    else:
        rir_in = last_planes - out_planes
    assert rir_in <= LANE and in_planes <= OFF and out_planes + 3 * dd <= OFF
    mats, vecs = [], []
    for idx, k in enumerate(KS):
        M, V = _init_block_branch(rng, rir_in, in_planes, out_planes, dd, k, idx)
        mats.append(M)
        vecs.append(V)
    p['mats'] = jnp.asarray(np.stack(mats), jnp.bfloat16)   # (3, 2, 4*LANE, LANE)
    p['vecs'] = jnp.asarray(np.stack(vecs), jnp.float32)    # (3, 2, VROWS, LANE)
    if root:
        p['shortcut'] = init_conv1x1_in(rng, last_planes, 2 * out_planes + dd)
    return p


def bb_out_planes(p):
    if p['is_unify'] or p['root']:
        return 2 * p['out_planes'] + 4 * p['dense_depth']
    return p['last_planes'] + 3 * p['dense_depth']


def init_tree(rng, last_planes, in_planes, out_planes, dd, level, block_num):
    t = {'level': level, 'block_num': block_num, 'out_planes': out_planes}
    if level == 1:
        lp, blocks = last_planes, []
        for i in range(block_num):
            unify = (lp < 2 * out_planes) if i == 0 else False
            bb = init_basic_block(rng, lp, in_planes, out_planes, dd, False, unify)
            lp = bb_out_planes(bb)
            blocks.append(bb)
        t['blocks'] = blocks
        root_lp = 2 * out_planes * (block_num - 1) + lp
    else:
        t['prev_root'] = init_basic_block(rng, last_planes, in_planes, out_planes, dd,
                                          False, last_planes < 2 * out_planes)
        root_lp = 2 * out_planes * (block_num - 1) + bb_out_planes(t['prev_root'])
        lp, levels = last_planes, {}
        for i in reversed(range(1, level)):
            st = init_tree(rng, lp, in_planes, out_planes, dd, i, block_num)
            lp = tree_out_planes(st)
            root_lp += lp
            levels[i] = st
        t['levels'] = levels
        blocks = []
        for i in range(block_num):
            bb = init_basic_block(rng, lp, in_planes, out_planes, dd, False, False)
            lp = bb_out_planes(bb)
            blocks.append(bb)
        t['blocks'] = blocks
        root_lp += lp
    t['root'] = init_basic_block(rng, root_lp, in_planes * block_num, out_planes, dd, True, False)
    return t


def tree_out_planes(t):
    return bb_out_planes(t['root'])


# ----------------------------- forward wrappers -----------------------------------------------

def _pad_lanes(x):
    n, hw, c = x.shape
    assert c <= LANE
    if c == LANE:
        return x
    return jnp.pad(x, ((0, 0), (0, 0), (0, LANE - c)))


def conv1x1_in(x, p):
    # 1x1 conv + InstanceNorm (unify / shortcut branch)
    n, h, w, c = x.shape
    xf = _pad_lanes(x.reshape(n, h * w, c))
    o = _conv_in_call(n, h * w)(xf, p['w'], p['bga'])
    return o[..., :p['cout']].reshape(n, h, w, p['cout'])


def basic_block_forward(p, x):
    d, dd = p['out_planes'], p['dense_depth']
    n, h, w, _ = x.shape
    if p['unify'] is not None:
        x = conv1x1_in(x, p['unify'])
    xr = jnp.concatenate([x[..., :d], x[..., 2 * d:]], axis=-1)
    xt = x[..., d:]
    xr_pf = _pad_lanes(xr.reshape(n, h * w, xr.shape[-1]))
    xt_pf = _pad_lanes(xt.reshape(n, h * w, xt.shape[-1]))
    o = _block_call(n, h, w)(xr_pf, xt_pf, p['mats'], p['vecs']).reshape(n, h, w, LANE)
    if p['shortcut'] is not None:
        x = conv1x1_in(x, p['shortcut'])
    return jnp.concatenate([
        x[..., :d] + o[..., :d],          # shortcut + sum_k residual_k[:d]
        o[..., OFF:OFF + d],              # sum_k transient_k
        x[..., 2 * d:],
        o[..., d:d + 3 * dd]], axis=-1)   # the three per-branch dense-depth tails (k=3,5,7)


def tree_forward(t, x):
    d = t['out_planes']
    xs = []
    if t['level'] > 1:
        xs.append(basic_block_forward(t['prev_root'], x))
        for i in reversed(range(1, t['level'])):
            x = tree_forward(t['levels'][i], x)
            xs.append(x)
    for bb in t['blocks']:
        x = basic_block_forward(bb, x)
        xs.append(x[..., :2 * d])
    xs.append(x[..., 2 * d:])
    return basic_block_forward(t['root'], jnp.concatenate(xs, axis=-1))


def tree_apply(params, x_nchw):
    # layout: NCHW in / NCHW out; NHWC internally (lanes = channels).
    x = jnp.transpose(x_nchw.astype(jnp.float32), (0, 2, 3, 1))
    y = tree_forward(params, x)
    return jnp.transpose(y, (0, 3, 1, 2))


# ----------------------------- demo ------------------------------------------------------------

if __name__ == "__main__":
    # Tree(last_planes=4, in_planes=4, out_planes=4, dense_depth=1, level=2, block_num=2,
    #      feature_size=16) applied to x of shape (2, 4, 16, 16).
    N, C, H, W = 2, 4, 16, 16
    IN_PLANES, OUT_PLANES, DENSE_DEPTH, LEVEL, BLOCK_NUM = 4, 4, 1, 2, 2
    FEATURE_SIZE = 16                       # SE avg-pool == global pool (feature_size == H == W)
    assert FEATURE_SIZE == H == W and (H * W) % 8 == 0

    rng = np.random.default_rng(0)
    params = init_tree(rng, C, IN_PLANES, OUT_PLANES, DENSE_DEPTH, LEVEL, BLOCK_NUM)
    x = jax.random.normal(jax.random.PRNGKey(0), (N, C, H, W), jnp.float32)

    fwd = jax.jit(functools.partial(tree_apply, params))
    out = jax.block_until_ready(fwd(x))

    expect_c = bb_out_planes(params['root'])    # 2*out_planes + 4*dense_depth = 12
    assert out.shape == (N, expect_c, H, W), out.shape
    assert bool(jnp.all(jnp.isfinite(out)))
    print("KERNEL_OK")
</pallas_src>

<mosaic_0001>
module attributes {stable_mosaic.version = 11 : i64} {
  func.func @_conv_in_kernel(%arg0: i32, %arg1: memref<1x256x128xf32, #tpu.memory_space<vmem>>, %arg2: memref<128x128xbf16, #tpu.memory_space<vmem>>, %arg3: memref<8x128xf32, #tpu.memory_space<vmem>>, %arg4: memref<1x256x128xf32, #tpu.memory_space<vmem>>) attributes {dimension_semantics = [#tpu.dimension_semantics<parallel>], iteration_bounds = array<i64: 2>, scalar_prefetch = 0 : i64, scratch_operands = 0 : i64, tpu.core_type = #tpu.core_type<tc>, window_params = [{transform_indices = @transform_0, window_bounds = array<i64: 1, 256, 128>}, {pipeline_mode = #tpu.pipeline_mode<synchronous>, transform_indices = @transform_1, window_bounds = array<i64: 128, 128>}, {pipeline_mode = #tpu.pipeline_mode<synchronous>, transform_indices = @transform_2, window_bounds = array<i64: 8, 128>}, {transform_indices = @transform_3, window_bounds = array<i64: 1, 256, 128>}]} {
    %c0 = arith.constant 0 : index
    %c0_0 = arith.constant 0 : index
    %c0_1 = arith.constant 0 : index
    %0 = vector.load %arg1[%c0, %c0_0, %c0_1] : memref<1x256x128xf32, #tpu.memory_space<vmem>>, vector<1x256x128xf32>
    %1 = vector.shape_cast %0 : vector<1x256x128xf32> to vector<256x128xf32>
    %2 = arith.truncf %1 : vector<256x128xf32> to vector<256x128xbf16>
    %c0_2 = arith.constant 0 : index
    %c0_3 = arith.constant 0 : index
    %3 = vector.load %arg2[%c0_2, %c0_3] : memref<128x128xbf16, #tpu.memory_space<vmem>>, vector<128x128xbf16>
    %cst = arith.constant dense<0.000000e+00> : vector<256x128xf32>
    %4 = tpu.matmul %2, %3, %cst {dimension_numbers = #tpu.dot_dimension_numbers<[1], [0], [0], [1], [0, 0, 1, 1], [], []>} : vector<256x128xbf16>, vector<128x128xbf16>, vector<256x128xf32> -> vector<256x128xf32>
    %c0_4 = arith.constant 0 : index
    %c0_5 = arith.constant 0 : index
    %5 = vector.load %arg3[%c0_4, %c0_5] : memref<8x128xf32, #tpu.memory_space<vmem>>, vector<1x128xf32>
    %6 = vector.broadcast %5 : vector<1x128xf32> to vector<256x128xf32>
    %7 = arith.addf %4, %6 : vector<256x128xf32>
    %c1 = arith.constant 1 : index
    %c0_6 = arith.constant 0 : index
    %8 = vector.load %arg3[%c1, %c0_6] : memref<8x128xf32, #tpu.memory_space<vmem>>, vector<1x128xf32>
    %c2 = arith.constant 2 : index
    %c0_7 = arith.constant 0 : index
    %9 = vector.load %arg3[%c2, %c0_7] : memref<8x128xf32, #tpu.memory_space<vmem>>, vector<1x128xf32>
    %cst_8 = arith.constant dense<0.000000e+00> : vector<128xf32>
    %10 = vector.multi_reduction <add>, %7, %cst_8 [0] : vector<256x128xf32> to vector<128xf32>
    %11 = vector.shape_cast %10 : vector<128xf32> to vector<1x128xf32>
    %cst_9 = arith.constant 2.560000e+02 : f32
    %12 = vector.broadcast %cst_9 : f32 to vector<1x128xf32>
    %13 = arith.divf %11, %12 : vector<1x128xf32>
    %14 = vector.broadcast %13 : vector<1x128xf32> to vector<256x128xf32>
    %15 = arith.subf %7, %14 : vector<256x128xf32>
    %16 = arith.mulf %15, %15 : vector<256x128xf32>
    %cst_10 = arith.constant dense<0.000000e+00> : vector<128xf32>
    %17 = vector.multi_reduction <add>, %16, %cst_10 [0] : vector<256x128xf32> to vector<128xf32>
    %18 = vector.shape_cast %17 : vector<128xf32> to vector<1x128xf32>
    %cst_11 = arith.constant 2.560000e+02 : f32
    %19 = vector.broadcast %cst_11 : f32 to vector<1x128xf32>
    %20 = arith.divf %18, %19 : vector<1x128xf32>
    %21 = vector.broadcast %13 : vector<1x128xf32> to vector<256x128xf32>
    %22 = arith.subf %7, %21 : vector<256x128xf32>
    %cst_12 = arith.constant 9.99999974E-6 : f32
    %23 = vector.broadcast %cst_12 : f32 to vector<1x128xf32>
    %24 = arith.addf %20, %23 : vector<1x128xf32>
    %25 = math.rsqrt %24 : vector<1x128xf32>
    %26 = vector.broadcast %25 : vector<1x128xf32> to vector<256x128xf32>
    %27 = arith.mulf %22, %26 : vector<256x128xf32>
    %28 = vector.broadcast %8 : vector<1x128xf32> to vector<256x128xf32>
    %29 = arith.mulf %27, %28 : vector<256x128xf32>
    %30 = vector.broadcast %9 : vector<1x128xf32> to vector<256x128xf32>
    %31 = arith.addf %29, %30 : vector<256x128xf32>
    %32 = vector.shape_cast %31 : vector<256x128xf32> to vector<1x256x128xf32>
    %c0_13 = arith.constant 0 : index
    %c0_14 = arith.constant 0 : index
    %c0_15 = arith.constant 0 : index
    %33 = vector.load %arg4[%c0_13, %c0_14, %c0_15] : memref<1x256x128xf32, #tpu.memory_space<vmem>>, vector<1x256x128xf32>
    tpu.vector_store %arg4[%c0_13, %c0_14, %c0_15], %32 {strides = array<i32>} : memref<1x256x128xf32, #tpu.memory_space<vmem>>, vector<1x256x128xf32>,
    return
  }
  func.func @transform_0(%arg0: i32) -> (i32, i32, i32) {
    %c0_i32 = arith.constant 0 : i32
    %c0_i32_0 = arith.constant 0 : i32
    %c0_i32_1 = arith.constant 0 : i32
    return %arg0, %c0_i32, %c0_i32_0 : i32, i32, i32
  }
  func.func @transform_1(%arg0: i32) -> (i32, i32) {
    %c0_i32 = arith.constant 0 : i32
    %c0_i32_0 = arith.constant 0 : i32
    %c0_i32_1 = arith.constant 0 : i32
    return %c0_i32, %c0_i32_0 : i32, i32
  }
  func.func @transform_2(%arg0: i32) -> (i32, i32) {
    %c0_i32 = arith.constant 0 : i32
    %c0_i32_0 = arith.constant 0 : i32
    %c0_i32_1 = arith.constant 0 : i32
    return %c0_i32, %c0_i32_0 : i32, i32
  }
  func.func @transform_3(%arg0: i32) -> (i32, i32, i32) {
    %c0_i32 = arith.constant 0 : i32
    %c0_i32_0 = arith.constant 0 : i32
    %c0_i32_1 = arith.constant 0 : i32
    return %arg0, %c0_i32, %c0_i32_0 : i32, i32, i32
  }
}

</mosaic_0001>

<llo_original>
// kernel: tpu_custom_call.1
$region0: #{tpu_custom_call.1}
  #allocation0 [shape = 'u32[]', space=smem, size = 0x4, offset = 0x4, fixed_abs, tag = 'smem constant byte address 0x4 - core index']
  #allocation1 [shape = 'u32[144,128]{1,0:T(1,128)}', space=vmem, size = 0x12000, scoped, tag = 'internal scratch']
  %s0 = inlined_call_operand.hbm [shape: f32[2,256,128], index: 0, kind: input, shape index: {}]
  %s1 = inlined_call_operand.hbm [shape: bf16[128,128], index: 1, kind: input, shape index: {}]
  %s2 = inlined_call_operand.hbm [shape: f32[8,128], index: 2, kind: input, shape index: {}]
  %s3 = inlined_call_operand.hbm [shape: f32[2,256,128], index: 3, kind: output, shape index: {}]
  %s4 = sld [smem:[#allocation0]]
  $region57: #{tpu_custom_call.1} parent=0
    _
  %s6 = ssub.s32 1, %s4
  %s7 = scalar_select 0, %s6, %s4
  $region1: #{tpu_custom_call.1} parent=0
    #allocation2 [shape = 'u8[262144]{0}', space=vmem, size = 0x40000, scoped, tag = 'input window, operand 0']
    #allocation3 [shape = 's32[2]{0}', space=sflag, size = 0x8, scoped, tag = 'scoped memory for tpu_custom_call.1']
    #allocation4 [shape = 's32[2]{0}', space=sflag, size = 0x8, scoped, tag = 'scoped memory for tpu_custom_call.1']
    #allocation5 [shape = 'u8[32768]{0}', space=vmem, size = 0x8000, scoped, tag = 'input window, operand 1, single buffered']
    #allocation6 [shape = 's32[1]{0}', space=sflag, size = 0x4, scoped, tag = 'scoped memory for tpu_custom_call.1']
    #allocation7 [shape = 'u8[4096]{0}', space=vmem, size = 0x1000, scoped, tag = 'input window, operand 2, single buffered']
    #allocation8 [shape = 'u8[262144]{0}', space=vmem, size = 0x40000, scoped, tag = 'output window, operand 0']
    %8 = vsyncpa [#allocation3], 0
    %s9 = scalar_lea.sflag [#allocation3], 1
    %10 = vsyncpa %s9, 0
    %11 = vsyncpa [#allocation6], 0
    %12 = vsyncpa [#allocation4], 0
    %s13 = scalar_lea.sflag [#allocation4], 1
    %14 = vsyncpa %s13, 0
    loop: start=0, step=1, limit=4
    $region2: #{tpu_custom_call.1} parent=1 // loop_pre_header
      _
    $region3: #{tpu_custom_call.1} parent=1 // loop_header
      %s16 = sphi 0, %s20
      %p17 = scmp.ge.s32.totalorder %s16, 4
      %s26 = sphi 0, %s28
      %s29 = sphi 0, %s26
      %s30 = sphi 0, %s29
      %s46 = sphi 0, %s30
      %s50 = sphi 0, %s50
      %s52 = sphi 0, %s50
      %s53 = sphi 0, %s52
      %s67 = sphi 0, %s53
      %s71 = sphi 0, %s71
      %s73 = sphi 0, %s71
      %s74 = sphi 0, %s73
      %s88 = sphi 0, %s74
      %s94 = sphi 0, %s96
      %s97 = sphi 0, %s94
      %s98 = sphi 0, %s97
      %s114 = sphi 0, %s98
    $region4: #{tpu_custom_call.1} parent=1 // loop_header_branch
      %19 = sbr.rel (%p17) target = $region8
    $region5: #{tpu_custom_call.1} parent=1 // loop_body
      %s21 = ssub.s32 %s16, 1
      %s22 = ssub.s32 %s16, 2
      %s23 = sadd.s32 %s16, 1
      %s24 = ssub.s32 %s16, %s23
      %p25 = scmp.eq.s32.totalorder %s24, 0
      %s27 = sadd.s32 %s26, 1
      %s28 = scalar_select %p25, %s26, %s27
      %p31 = pneg %p25
      %p32 = scmp.eq.s32.totalorder %s16, 1
      %p33 = por %p31, %p32
      %p34 = scmp.ne.s32.totalorder %s26, %s29
      %p35 = scmp.eq.s32.totalorder %s16, 0
      %p36 = por %p34, %p35
      %p37 = scmp.ne.s32.totalorder %s26, %s29
      %p38 = scmp.eq.s32.totalorder %s21, 1
      %p39 = por %p37, %p38
      %p40 = scmp.ne.s32.totalorder %s29, %s30
      %p41 = scmp.eq.s32.totalorder %s21, 0
      %p42 = por %p40, %p41
      %p43 = scmp.ne.s32.totalorder %s29, %s30
      %p44 = scmp.eq.s32.totalorder %s22, 1
      %p45 = por %p43, %p44
      %p47 = scmp.ne.s32.totalorder %s30, %s46
      %p48 = scmp.eq.s32.totalorder %s22, 0
      %p49 = por %p47, %p48
      %s51 = sadd.s32 %s50, 1
      %p54 = scmp.eq.s32.totalorder %s16, 1
      %p55 = scmp.ne.s32.totalorder %s50, %s52
      %p56 = scmp.eq.s32.totalorder %s16, 0
      %p57 = por %p55, %p56
      %p58 = scmp.ne.s32.totalorder %s50, %s52
      %p59 = scmp.eq.s32.totalorder %s21, 1
      %p60 = por %p58, %p59
      %p61 = scmp.ne.s32.totalorder %s52, %s53
      %p62 = scmp.eq.s32.totalorder %s21, 0
      %p63 = por %p61, %p62
      %p64 = scmp.ne.s32.totalorder %s52, %s53
      %p65 = scmp.eq.s32.totalorder %s22, 1
      %p66 = por %p64, %p65
      %p68 = scmp.ne.s32.totalorder %s53, %s67
      %p69 = scmp.eq.s32.totalorder %s22, 0
      %p70 = por %p68, %p69
      %s72 = sadd.s32 %s71, 1
      %p75 = scmp.eq.s32.totalorder %s16, 1
      %p76 = scmp.ne.s32.totalorder %s71, %s73
      %p77 = scmp.eq.s32.totalorder %s16, 0
      %p78 = por %p76, %p77
      %p79 = scmp.ne.s32.totalorder %s71, %s73
      %p80 = scmp.eq.s32.totalorder %s21, 1
      %p81 = por %p79, %p80
      %p82 = scmp.ne.s32.totalorder %s73, %s74
      %p83 = scmp.eq.s32.totalorder %s21, 0
      %p84 = por %p82, %p83
      %p85 = scmp.ne.s32.totalorder %s73, %s74
      %p86 = scmp.eq.s32.totalorder %s22, 1
      %p87 = por %p85, %p86
      %p89 = scmp.ne.s32.totalorder %s74, %s88
      %p90 = scmp.eq.s32.totalorder %s22, 0
      %p91 = por %p89, %p90
      %s92 = ssub.s32 %s16, %s23
      %p93 = scmp.eq.s32.totalorder %s92, 0
      %s95 = sadd.s32 %s94, 1
      %s96 = scalar_select %p93, %s94, %s95
      %p99 = pneg %p93
      %p100 = scmp.eq.s32.totalorder %s16, 1
      %p101 = por %p99, %p100
      %p102 = scmp.ne.s32.totalorder %s94, %s97
      %p103 = scmp.eq.s32.totalorder %s16, 0
      %p104 = por %p102, %p103
      %p105 = scmp.ne.s32.totalorder %s94, %s97
      %p106 = scmp.eq.s32.totalorder %s21, 1
      %p107 = por %p105, %p106
      %p108 = scmp.ne.s32.totalorder %s97, %s98
      %p109 = scmp.eq.s32.totalorder %s21, 0
      %p110 = por %p108, %p109
      %p111 = scmp.ne.s32.totalorder %s97, %s98
      %p112 = scmp.eq.s32.totalorder %s22, 1
      %p113 = por %p111, %p112
      %p115 = scmp.ne.s32.totalorder %s98, %s114
      %p116 = scmp.eq.s32.totalorder %s22, 0
      %p117 = por %p115, %p116
      %p118 = scmp.le.s32.totalorder 1, %s16
      %p119 = scmp.lt.s32.totalorder %s16, 3
      %p120 = pnand %p118, %p119
      %p121 = pneg %p120
      // Predicated region
      $region9: #{tpu_custom_call.1} parent=5 // pred_check
        _
      $region10: #{tpu_custom_call.1} parent=5 // pred_check_branch
        %123 = sbr.rel (%p120) target = $region12
      $region11: #{tpu_custom_call.1} parent=5 // pred_region
        %s124 = ssub.s32 %s16, 1
        // Predicated region
        $region13: #{tpu_custom_call.1} parent=11 // pred_check
          %p125 = pneg %p63
        $region14: #{tpu_custom_call.1} parent=11 // pred_check_branch
          %127 = sbr.rel (%p125) target = $region16
        $region15: #{tpu_custom_call.1} parent=11 // pred_region
          %s129 = ssub.s32 1024, 1024
          %130 = vsyncadd [#allocation6], %s129
          %s131 = sshll.u32 [#allocation5], 4
          %s132 = int_to_ptr.vmem [resolvable:$true] %s131
          %137 = dma.hbm_to_vmem [thread:$0]  %s1, 1024, %s132, [#allocation6], 64, 64, 4
        $region16: #{tpu_custom_call.1} parent=11 // pred_fallthru
          _
        // Predicated region
        $region17: #{tpu_custom_call.1} parent=11 // pred_check
          %p138 = pneg %p84
        $region18: #{tpu_custom_call.1} parent=11 // pred_check_branch
          %140 = sbr.rel (%p138) target = $region20
        $region19: #{tpu_custom_call.1} parent=11 // pred_region
          %s142 = ssub.s32 128, 128
          %143 = vsyncadd [#allocation6], %s142
          %s145 = sshll.u32 [#allocation7], 4
          %s146 = int_to_ptr.vmem [resolvable:$true] %s145
          %148 = dma.hbm_to_vmem [thread:$0]  %s2, 128, %s146, [#allocation6]
        $region20: #{tpu_custom_call.1} parent=11 // pred_fallthru
          _
      $region12: #{tpu_custom_call.1} parent=5 // pred_fallthru
        _
      %p149 = scmp.lt.s32.totalorder %s16, 2
      // Predicated region
      $region21: #{tpu_custom_call.1} parent=5 // pred_check
        %p150 = pneg %p149
      $region22: #{tpu_custom_call.1} parent=5 // pred_check_branch
        %152 = sbr.rel (%p150) target = $region24
      $region23: #{tpu_custom_call.1} parent=5 // pred_region
        // Predicated region
        $region25: #{tpu_custom_call.1} parent=23 // pred_check
          %p153 = pneg %p36
        $region26: #{tpu_custom_call.1} parent=23 // pred_check_branch
          %155 = sbr.rel (%p153) target = $region28
        $region27: #{tpu_custom_call.1} parent=23 // pred_region
          %s156 = sand.u32 %s26, 1
          %s157 = scalar_lea.sflag [#allocation3], %s156
          %s158 = sand.u32 %s26, 1
          %s159 = smul.addr %s158, 256
          %s160 = scalar_lea.vmem [#allocation2], %s159
          %s162 = ssub.s32 4096, 4096
          %163 = vsyncadd %s157, %s162
          %s164 = smul.addr %s16, 32
          %s165 = smul.addr %s164, 128
          %s166 = scalar_lea.hbm %s0, %s165
          %s167 = sshll.u32 %s160, 4
          %s168 = int_to_ptr.vmem [resolvable:$true] %s167
          %173 = dma.hbm_to_vmem [thread:$0]  %s166, 4096, %s168, %s157, 128, 128, 8
        $region28: #{tpu_custom_call.1} parent=23 // pred_fallthru
          _
      $region24: #{tpu_custom_call.1} parent=5 // pred_fallthru
        _
      %p174 = scmp.le.s32.totalorder 1, %s16
      %p175 = scmp.lt.s32.totalorder %s16, 3
      %p176 = pnand %p174, %p175
      %p177 = pneg %p176
      // Predicated region
      $region29: #{tpu_custom_call.1} parent=5 // pred_check
        _
      $region30: #{tpu_custom_call.1} parent=5 // pred_check_branch
        %179 = sbr.rel (%p176) target = $region32
      $region31: #{tpu_custom_call.1} parent=5 // pred_region
        %s180 = ssub.s32 %s16, 1
        %s181 = sand.u32 %s29, 1
        %s182 = scalar_lea.sflag [#allocation3], %s181
        %s183 = sand.u32 %s29, 1
        %s184 = smul.addr %s183, 256
        %s185 = scalar_lea.vmem [#allocation2], %s184
        // Predicated region
        $region33: #{tpu_custom_call.1} parent=31 // pred_check
          %p186 = pneg %p42
        $region34: #{tpu_custom_call.1} parent=31 // pred_check_branch
          %188 = sbr.rel (%p186) target = $region36
        $region35: #{tpu_custom_call.1} parent=31 // pred_region
          %189 = dma.done %s182, 4096
        $region36: #{tpu_custom_call.1} parent=31 // pred_fallthru
          _
        // Predicated region
        $region37: #{tpu_custom_call.1} parent=31 // pred_check
          %p190 = pneg %p63
        $region38: #{tpu_custom_call.1} parent=31 // pred_check_branch
          %192 = sbr.rel (%p190) target = $region40
        $region39: #{tpu_custom_call.1} parent=31 // pred_region
          %193 = dma.done [#allocation6], 1024
        $region40: #{tpu_custom_call.1} parent=31 // pred_fallthru
          _
        // Predicated region
        $region41: #{tpu_custom_call.1} parent=31 // pred_check
          %p194 = pneg %p84
        $region42: #{tpu_custom_call.1} parent=31 // pred_check_branch
          %196 = sbr.rel (%p194) target = $region44
        $region43: #{tpu_custom_call.1} parent=31 // pred_region
          %197 = dma.done [#allocation6], 128
        $region44: #{tpu_custom_call.1} parent=31 // pred_fallthru
          _
        %s198 = sand.u32 %s29, 1
        %s199 = scalar_lea.sflag [#allocation3], %s198
        %s200 = sand.u32 %s29, 1
        %s201 = smul.addr %s200, 256
        %s202 = scalar_lea.vmem [#allocation2], %s201
        %p203 = pneg %p42
        %p204 = pneg %p39
        %p205 = pneg %p63
        %p206 = pneg %p60
        %p207 = pneg %p84
        %p208 = pneg %p81
        %p209 = pneg %p110
        %p210 = pneg %p107
        %s211 = sand.u32 %s97, 1
        %s212 = scalar_lea.sflag [#allocation4], %s211
        %s213 = sand.u32 %s97, 1
        %s214 = smul.addr %s213, 256
        %s215 = scalar_lea.vmem [#allocation8], %s214
        %v217 = vld [vmem:[%s185] sm:$0xff]
        %v218 = vld [vmem:[%s185 + $0x8] sm:$0xff]
        %v219 = vld [vmem:[%s185 + $0x10] sm:$0xff]
        %v220 = vld [vmem:[%s185 + $0x18] sm:$0xff]
        %v221 = vld [vmem:[%s185 + $0x20] sm:$0xff]
        %v222 = vld [vmem:[%s185 + $0x28] sm:$0xff]
        %v223 = vld [vmem:[%s185 + $0x30] sm:$0xff]
        %v224 = vld [vmem:[%s185 + $0x38] sm:$0xff]
        %v225 = vld [vmem:[%s185 + $0x40] sm:$0xff]
        %v226 = vld [vmem:[%s185 + $0x48] sm:$0xff]
        %v227 = vld [vmem:[%s185 + $0x50] sm:$0xff]
        %v228 = vld [vmem:[%s185 + $0x58] sm:$0xff]
        %v229 = vld [vmem:[%s185 + $0x60] sm:$0xff]
        %v230 = vld [vmem:[%s185 + $0x68] sm:$0xff]
        %v231 = vld [vmem:[%s185 + $0x70] sm:$0xff]
        %v232 = vld [vmem:[%s185 + $0x78] sm:$0xff]
        %v233 = vld [vmem:[%s185 + $0x80] sm:$0xff]
        %v234 = vld [vmem:[%s185 + $0x88] sm:$0xff]
        %v235 = vld [vmem:[%s185 + $0x90] sm:$0xff]
        %v236 = vld [vmem:[%s185 + $0x98] sm:$0xff]
        %v237 = vld [vmem:[%s185 + $0xa0] sm:$0xff]
        %v238 = vld [vmem:[%s185 + $0xa8] sm:$0xff]
        %v239 = vld [vmem:[%s185 + $0xb0] sm:$0xff]
        %v240 = vld [vmem:[%s185 + $0xb8] sm:$0xff]
        %v241 = vld [vmem:[%s185 + $0xc0] sm:$0xff]
        %v242 = vld [vmem:[%s185 + $0xc8] sm:$0xff]
        %v243 = vld [vmem:[%s185 + $0xd0] sm:$0xff]
        %v244 = vld [vmem:[%s185 + $0xd8] sm:$0xff]
        %v245 = vld [vmem:[%s185 + $0xe0] sm:$0xff]
        %v246 = vld [vmem:[%s185 + $0xe8] sm:$0xff]
        %v247 = vld [vmem:[%s185 + $0xf0] sm:$0xff]
        %v248 = vld [vmem:[%s185 + $0xf8] sm:$0xff]
        %v249 = vpack.c.bf16 %v218, %v217
        %v250 = vpack.c.bf16 %v220, %v219
        %v251 = vpack.c.bf16 %v222, %v221
        %v252 = vpack.c.bf16 %v224, %v223
        %v253 = vpack.c.bf16 %v226, %v225
        %v254 = vpack.c.bf16 %v228, %v227
        %v255 = vpack.c.bf16 %v230, %v229
        %v256 = vpack.c.bf16 %v232, %v231
        %v257 = vpack.c.bf16 %v234, %v233
        %v258 = vpack.c.bf16 %v236, %v235
        %v259 = vpack.c.bf16 %v238, %v237
        %v260 = vpack.c.bf16 %v240, %v239
        %v261 = vpack.c.bf16 %v242, %v241
        %v262 = vpack.c.bf16 %v244, %v243
        %v263 = vpack.c.bf16 %v246, %v245
        %v264 = vpack.c.bf16 %v248, %v247
        %v265 = vld [vmem:[#allocation5] sm:$0xf]
        %v266 = vld [vmem:[#allocation5 + $0x4] sm:$0xf]
        %v267 = vld [vmem:[#allocation5 + $0x8] sm:$0xf]
        %v268 = vld [vmem:[#allocation5 + $0xc] sm:$0xf]
        %v269 = vld [vmem:[#allocation5 + $0x10] sm:$0xf]
        %v270 = vld [vmem:[#allocation5 + $0x14] sm:$0xf]
        %v271 = vld [vmem:[#allocation5 + $0x18] sm:$0xf]
        %v272 = vld [vmem:[#allocation5 + $0x1c] sm:$0xf]
        %v273 = vld [vmem:[#allocation5 + $0x20] sm:$0xf]
        %v274 = vld [vmem:[#allocation5 + $0x24] sm:$0xf]
        %v275 = vld [vmem:[#allocation5 + $0x28] sm:$0xf]
        %v276 = vld [vmem:[#allocation5 + $0x2c] sm:$0xf]
        %v277 = vld [vmem:[#allocation5 + $0x30] sm:$0xf]
        %v278 = vld [vmem:[#allocation5 + $0x34] sm:$0xf]
        %v279 = vld [vmem:[#allocation5 + $0x38] sm:$0xf]
        %v280 = vld [vmem:[#allocation5 + $0x3c] sm:$0xf]
        %v281 = vld [vmem:[#allocation7] sm:$0x1]
        %v282 = vlaneseq
        %v283 = vshrl.u32 %v282, 7
        %v284 = vsub.s32 0, %v283
        %v285 = vrot.slane %v281, %v284
        %v302 = vunpack.c.l.b16 %v265
        %v303 = vunpack.c.l.b16 %v266
        %v304 = vunpack.c.l.b16 %v267
        %v305 = vunpack.c.l.b16 %v268
        %v306 = vunpack.c.l.b16 %v269
        %v307 = vunpack.c.l.b16 %v270
        %v308 = vunpack.c.l.b16 %v271
        %v309 = vunpack.c.l.b16 %v272
        %v310 = vunpack.c.l.b16 %v273
        %v311 = vunpack.c.l.b16 %v274
        %v312 = vunpack.c.l.b16 %v275
        %v313 = vunpack.c.l.b16 %v276
        %v314 = vunpack.c.l.b16 %v277
        %v315 = vunpack.c.l.b16 %v278
        %v316 = vunpack.c.l.b16 %v279
        %v317 = vunpack.c.l.b16 %v280
        %v318 = vpack.c.b16 %v303, %v302
        %v319 = vpack.c.b16 %v305, %v304
        %v320 = vpack.c.b16 %v307, %v306
        %v321 = vpack.c.b16 %v309, %v308
        %v322 = vpack.c.b16 %v311, %v310
        %v323 = vpack.c.b16 %v313, %v312
        %v324 = vpack.c.b16 %v315, %v314
        %v325 = vpack.c.b16 %v317, %v316
        %334 = vmatprep.subr.bf16.mxu0 0
        %335 = vmatpush1.bf16.msra.mxu0 %v325
        %336 = vmatprep.subr.bf16.mxu0 0
        %337 = vmatpush1.bf16.msra.mxu0 %v324
        %338 = vmatprep.subr.bf16.mxu0 0
        %339 = vmatpush1.bf16.msra.mxu0 %v323
        %340 = vmatprep.subr.bf16.mxu0 0
        %341 = vmatpush1.bf16.msra.mxu0 %v322
        %342 = vmatprep.subr.bf16.mxu0 0
        %343 = vmatpush1.bf16.msra.mxu0 %v321
        %344 = vmatprep.subr.bf16.mxu0 0
        %345 = vmatpush1.bf16.msra.mxu0 %v320
        %346 = vmatprep.subr.bf16.mxu0 0
        %347 = vmatpush1.bf16.msra.mxu0 %v319
        %348 = vmatprep.subr.bf16.mxu0 0
        %349 = vmatpush1.bf16.msra.mxu0 %v318
        %350 = vmatprep.subr.bf16.mxu0 0
        %351 = vmatpush2.bf16.msra.mxu0 0
        %352 = vmatprep.subr.bf16.mxu0 0
        %353 = vmatpush2.bf16.msra.mxu0 0
        %354 = vmatprep.subr.bf16.mxu0 0
        %355 = vmatpush2.bf16.msra.mxu0 0
        %356 = vmatprep.subr.bf16.mxu0 0
        %357 = vmatpush2.bf16.msra.mxu0 0
        %358 = vmatprep.subr.bf16.mxu0 0
        %359 = vmatpush2.bf16.msra.mxu0 0
        %360 = vmatprep.subr.bf16.mxu0 0
        %361 = vmatpush2.bf16.msra.mxu0 0
        %362 = vmatprep.subr.bf16.mxu0 0
        %363 = vmatpush2.bf16.msra.mxu0 0
        %364 = vmatprep.subr.bf16.mxu0 0
        %365 = vmatpush2.bf16.msra.mxu0 0
        %366 = vmatprep.mubr.bf16.mxu0 0
        %367 = vmatmul.mubr.bf16.gmra.mxu0 %v249
        %v368 = vpop.f32.mrf.mxu0
        %v369 = vadd.f32 %v285, %v368
        %v370 = vpop.f32.mrf.mxu0
        %v371 = vpop.f32.mrf.mxu0
        %v372 = vadd.f32 %v285, %v371
        %v373 = vpop.f32.mrf.mxu0
        %374 = vmatprep.mubr.bf16.mxu0 0
        %375 = vmatmul.mubr.bf16.gmra.mxu0 %v250
        %v376 = vpop.f32.mrf.mxu0
        %v377 = vadd.f32 %v285, %v376
        %v378 = vpop.f32.mrf.mxu0
        %v379 = vpop.f32.mrf.mxu0
        %v380 = vadd.f32 %v285, %v379
        %v381 = vpop.f32.mrf.mxu0
        %382 = vmatprep.mubr.bf16.mxu0 0
        %383 = vmatmul.mubr.bf16.gmra.mxu0 %v251
        %v384 = vpop.f32.mrf.mxu0
        %v385 = vadd.f32 %v285, %v384
        %v386 = vpop.f32.mrf.mxu0
        %v387 = vpop.f32.mrf.mxu0
        %v388 = vadd.f32 %v285, %v387
        %v389 = vpop.f32.mrf.mxu0
        %390 = vmatprep.mubr.bf16.mxu0 0
        %391 = vmatmul.mubr.bf16.gmra.mxu0 %v252
        %v392 = vpop.f32.mrf.mxu0
        %v393 = vadd.f32 %v285, %v392
        %v394 = vpop.f32.mrf.mxu0
        %v395 = vpop.f32.mrf.mxu0
        %v396 = vadd.f32 %v285, %v395
        %v397 = vpop.f32.mrf.mxu0
        %398 = vmatprep.mubr.bf16.mxu0 0
        %399 = vmatmul.mubr.bf16.gmra.mxu0 %v253
        %v400 = vpop.f32.mrf.mxu0
        %v401 = vadd.f32 %v285, %v400
        %v402 = vpop.f32.mrf.mxu0
        %v403 = vpop.f32.mrf.mxu0
        %v404 = vadd.f32 %v285, %v403
        %v405 = vpop.f32.mrf.mxu0
        %406 = vmatprep.mubr.bf16.mxu0 0
        %407 = vmatmul.mubr.bf16.gmra.mxu0 %v254
        %v408 = vpop.f32.mrf.mxu0
        %v409 = vadd.f32 %v285, %v408
        %v410 = vpop.f32.mrf.mxu0
        %v411 = vpop.f32.mrf.mxu0
        %v412 = vadd.f32 %v285, %v411
        %v413 = vpop.f32.mrf.mxu0
        %414 = vmatprep.mubr.bf16.mxu0 0
        %415 = vmatmul.mubr.bf16.gmra.mxu0 %v255
        %v416 = vpop.f32.mrf.mxu0
        %v417 = vadd.f32 %v285, %v416
        %v418 = vpop.f32.mrf.mxu0
        %v419 = vpop.f32.mrf.mxu0
        %v420 = vadd.f32 %v285, %v419
        %v421 = vpop.f32.mrf.mxu0
        %422 = vmatprep.mubr.bf16.mxu0 0
        %423 = vmatmul.mubr.bf16.gmra.mxu0 %v256
        %v424 = vpop.f32.mrf.mxu0
        %v425 = vadd.f32 %v285, %v424
        %v426 = vpop.f32.mrf.mxu0
        %v427 = vpop.f32.mrf.mxu0
        %v428 = vadd.f32 %v285, %v427
        %v429 = vpop.f32.mrf.mxu0
        %430 = vmatprep.mubr.bf16.mxu0 0
        %431 = vmatmul.mubr.bf16.gmra.mxu0 %v257
        %v432 = vpop.f32.mrf.mxu0
        %v433 = vadd.f32 %v285, %v432
        %v434 = vpop.f32.mrf.mxu0
        %v435 = vpop.f32.mrf.mxu0
        %v436 = vadd.f32 %v285, %v435
        %v437 = vpop.f32.mrf.mxu0
        %438 = vmatprep.mubr.bf16.mxu0 0
        %439 = vmatmul.mubr.bf16.gmra.mxu0 %v258
        %v440 = vpop.f32.mrf.mxu0
        %v441 = vadd.f32 %v285, %v440
        %v442 = vpop.f32.mrf.mxu0
        %v443 = vpop.f32.mrf.mxu0
        %v444 = vadd.f32 %v285, %v443
        %v445 = vpop.f32.mrf.mxu0
        %446 = vmatprep.mubr.bf16.mxu0 0
        %447 = vmatmul.mubr.bf16.gmra.mxu0 %v259
        %v448 = vpop.f32.mrf.mxu0
        %v449 = vadd.f32 %v285, %v448
        %v450 = vpop.f32.mrf.mxu0
        %v451 = vpop.f32.mrf.mxu0
        %v452 = vadd.f32 %v285, %v451
        %v453 = vpop.f32.mrf.mxu0
        %454 = vmatprep.mubr.bf16.mxu0 0
        %455 = vmatmul.mubr.bf16.gmra.mxu0 %v260
        %v456 = vpop.f32.mrf.mxu0
        %v457 = vadd.f32 %v285, %v456
        %v458 = vpop.f32.mrf.mxu0
        %v459 = vpop.f32.mrf.mxu0
        %v460 = vadd.f32 %v285, %v459
        %v461 = vpop.f32.mrf.mxu0
        %462 = vmatprep.mubr.bf16.mxu0 0
        %463 = vmatmul.mubr.bf16.gmra.mxu0 %v261
        %v464 = vpop.f32.mrf.mxu0
        %v465 = vadd.f32 %v285, %v464
        %v466 = vpop.f32.mrf.mxu0
        %v467 = vpop.f32.mrf.mxu0
        %v468 = vadd.f32 %v285, %v467
        %v469 = vpop.f32.mrf.mxu0
        %470 = vmatprep.mubr.bf16.mxu0 0
        %471 = vmatmul.mubr.bf16.gmra.mxu0 %v262
        %v472 = vpop.f32.mrf.mxu0
        %v473 = vadd.f32 %v285, %v472
        %v474 = vpop.f32.mrf.mxu0
        %v475 = vpop.f32.mrf.mxu0
        %v476 = vadd.f32 %v285, %v475
        %v477 = vpop.f32.mrf.mxu0
        %478 = vmatprep.mubr.bf16.mxu0 0
        %479 = vmatmul.mubr.bf16.gmra.mxu0 %v263
        %v480 = vpop.f32.mrf.mxu0
        %v481 = vadd.f32 %v285, %v480
        %v482 = vpop.f32.mrf.mxu0
        %v483 = vpop.f32.mrf.mxu0
        %v484 = vadd.f32 %v285, %v483
        %v485 = vpop.f32.mrf.mxu0
        %486 = vmatprep.mubr.bf16.mxu0 0
        %487 = vmatmul.mubr.bf16.gmra.mxu0 %v264
        %v488 = vpop.f32.mrf.mxu0
        %v489 = vadd.f32 %v285, %v488
        %v490 = vpop.f32.mrf.mxu0
        %v491 = vpop.f32.mrf.mxu0
        %v492 = vadd.f32 %v285, %v491
        %v493 = vpop.f32.mrf.mxu0
        %494 = vdwg.mxu0
        %v495 = vld [vmem:[#allocation7 + $0x1] sm:$0x1]
        %v496 = vld [vmem:[#allocation7 + $0x2] sm:$0x1]
        %v497 = vadd.f32 %v369, %v372
        %v498 = vadd.f32 %v497, %v377
        %v499 = vadd.f32 %v498, %v380
        %v500 = vadd.f32 %v499, %v385
        %v501 = vadd.f32 %v500, %v388
        %v502 = vadd.f32 %v501, %v393
        %v503 = vadd.f32 %v502, %v396
        %v504 = vadd.f32 %v503, %v401
        %v505 = vadd.f32 %v504, %v404
        %v506 = vadd.f32 %v505, %v409
        %v507 = vadd.f32 %v506, %v412
        %v508 = vadd.f32 %v507, %v417
        %v509 = vadd.f32 %v508, %v420
        %v510 = vadd.f32 %v509, %v425
        %v511 = vadd.f32 %v510, %v428
        %v512 = vadd.f32 %v511, %v433
        %v513 = vadd.f32 %v512, %v436
        %v514 = vadd.f32 %v513, %v441
        %v515 = vadd.f32 %v514, %v444
        %v516 = vadd.f32 %v515, %v449
        %v517 = vadd.f32 %v516, %v452
        %v518 = vadd.f32 %v517, %v457
        %v519 = vadd.f32 %v518, %v460
        %v520 = vadd.f32 %v519, %v465
        %v521 = vadd.f32 %v520, %v468
        %v522 = vadd.f32 %v521, %v473
        %v523 = vadd.f32 %v522, %v476
        %v524 = vadd.f32 %v523, %v481
        %v525 = vadd.f32 %v524, %v484
        %v526 = vadd.f32 %v525, %v489
        %v527 = vadd.f32 %v526, %v492
        %v528 = vrot.slane %v527, 4
        %v529 = vadd.f32 %v527, %v528
        %v530 = vrot.slane %v529, 2
        %v531 = vadd.f32 %v529, %v530
        %v532 = vrot.slane %v531, 1
        %v533 = vadd.f32 %v531, %v532
        %v534 = vrcp.pop 256.0
        %v535 = vmul.f32 %v533, %v534
        %v536 = vsub.f32 %v369, %v535
        %v537 = vsub.f32 %v372, %v535
        %v538 = vsub.f32 %v377, %v535
        %v539 = vsub.f32 %v380, %v535
        %v540 = vsub.f32 %v385, %v535
        %v541 = vsub.f32 %v388, %v535
        %v542 = vsub.f32 %v393, %v535
        %v543 = vsub.f32 %v396, %v535
        %v544 = vsub.f32 %v401, %v535
        %v545 = vsub.f32 %v404, %v535
        %v546 = vsub.f32 %v409, %v535
        %v547 = vsub.f32 %v412, %v535
        %v548 = vsub.f32 %v417, %v535
        %v549 = vsub.f32 %v420, %v535
        %v550 = vsub.f32 %v425, %v535
        %v551 = vsub.f32 %v428, %v535
        %v552 = vsub.f32 %v433, %v535
        %v553 = vsub.f32 %v436, %v535
        %v554 = vsub.f32 %v441, %v535
        %v555 = vsub.f32 %v444, %v535
        %v556 = vsub.f32 %v449, %v535
        %v557 = vsub.f32 %v452, %v535
        %v558 = vsub.f32 %v457, %v535
        %v559 = vsub.f32 %v460, %v535
        %v560 = vsub.f32 %v465, %v535
        %v561 = vsub.f32 %v468, %v535
        %v562 = vsub.f32 %v473, %v535
        %v563 = vsub.f32 %v476, %v535
        %v564 = vsub.f32 %v481, %v535
        %v565 = vsub.f32 %v484, %v535
        %v566 = vsub.f32 %v489, %v535
        %v567 = vsub.f32 %v492, %v535
        %v568 = vmul.f32 %v536, %v536
        %v569 = vmul.f32 %v537, %v537
        %v570 = vmul.f32 %v538, %v538
        %v571 = vmul.f32 %v539, %v539
        %v572 = vmul.f32 %v540, %v540
        %v573 = vmul.f32 %v541, %v541
        %v574 = vmul.f32 %v542, %v542
        %v575 = vmul.f32 %v543, %v543
        %v576 = vmul.f32 %v544, %v544
        %v577 = vmul.f32 %v545, %v545
        %v578 = vmul.f32 %v546, %v546
        %v579 = vmul.f32 %v547, %v547
        %v580 = vmul.f32 %v548, %v548
        %v581 = vmul.f32 %v549, %v549
        %v582 = vmul.f32 %v550, %v550
        %v583 = vmul.f32 %v551, %v551
        %v584 = vmul.f32 %v552, %v552
        %v585 = vmul.f32 %v553, %v553
        %v586 = vmul.f32 %v554, %v554
        %v587 = vmul.f32 %v555, %v555
        %v588 = vmul.f32 %v556, %v556
        %v589 = vmul.f32 %v557, %v557
        %v590 = vmul.f32 %v558, %v558
        %v591 = vmul.f32 %v559, %v559
        %v592 = vmul.f32 %v560, %v560
        %v593 = vmul.f32 %v561, %v561
        %v594 = vmul.f32 %v562, %v562
        %v595 = vmul.f32 %v563, %v563
        %v596 = vmul.f32 %v564, %v564
        %v597 = vmul.f32 %v565, %v565
        %v598 = vmul.f32 %v566, %v566
        %v599 = vmul.f32 %v567, %v567
        %v600 = vadd.f32 %v568, %v569
        %v601 = vadd.f32 %v600, %v570
        %v602 = vadd.f32 %v601, %v571
        %v603 = vadd.f32 %v602, %v572
        %v604 = vadd.f32 %v603, %v573
        %v605 = vadd.f32 %v604, %v574
        %v606 = vadd.f32 %v605, %v575
        %v607 = vadd.f32 %v606, %v576
        %v608 = vadd.f32 %v607, %v577
        %v609 = vadd.f32 %v608, %v578
        %v610 = vadd.f32 %v609, %v579
        %v611 = vadd.f32 %v610, %v580
        %v612 = vadd.f32 %v611, %v581
        %v613 = vadd.f32 %v612, %v582
        %v614 = vadd.f32 %v613, %v583
        %v615 = vadd.f32 %v614, %v584
        %v616 = vadd.f32 %v615, %v585
        %v617 = vadd.f32 %v616, %v586
        %v618 = vadd.f32 %v617, %v587
        %v619 = vadd.f32 %v618, %v588
        %v620 = vadd.f32 %v619, %v589
        %v621 = vadd.f32 %v620, %v590
        %v622 = vadd.f32 %v621, %v591
        %v623 = vadd.f32 %v622, %v592
        %v624 = vadd.f32 %v623, %v593
        %v625 = vadd.f32 %v624, %v594
        %v626 = vadd.f32 %v625, %v595
        %v627 = vadd.f32 %v626, %v596
        %v628 = vadd.f32 %v627, %v597
        %v629 = vadd.f32 %v628, %v598
        %v630 = vadd.f32 %v629, %v599
        %v631 = vrot.slane %v630, 4
        %v632 = vadd.f32 %v630, %v631
        %v633 = vrot.slane %v632, 2
        %v634 = vadd.f32 %v632, %v633
        %v635 = vrot.slane %v634, 1
        %v636 = vadd.f32 %v634, %v635
        %v637 = vmul.f32 %v636, %v534
        %v638 = vadd.f32 %v637, 1e-05
        %v639 = vrsqrt.pop %v638
        %v640 = vmul.f32 %v536, %v639
        %v641 = vmul.f32 %v537, %v639
        %v642 = vmul.f32 %v538, %v639
        %v643 = vmul.f32 %v539, %v639
        %v644 = vmul.f32 %v540, %v639
        %v645 = vmul.f32 %v541, %v639
        %v646 = vmul.f32 %v542, %v639
        %v647 = vmul.f32 %v543, %v639
        %v648 = vmul.f32 %v544, %v639
        %v649 = vmul.f32 %v545, %v639
        %v650 = vmul.f32 %v546, %v639
        %v651 = vmul.f32 %v547, %v639
        %v652 = vmul.f32 %v548, %v639
        %v653 = vmul.f32 %v549, %v639
        %v654 = vmul.f32 %v550, %v639
        %v655 = vmul.f32 %v551, %v639
        %v656 = vmul.f32 %v552, %v639
        %v657 = vmul.f32 %v553, %v639
        %v658 = vmul.f32 %v554, %v639
        %v659 = vmul.f32 %v555, %v639
        %v660 = vmul.f32 %v556, %v639
        %v661 = vmul.f32 %v557, %v639
        %v662 = vmul.f32 %v558, %v639
        %v663 = vmul.f32 %v559, %v639
        %v664 = vmul.f32 %v560, %v639
        %v665 = vmul.f32 %v561, %v639
        %v666 = vmul.f32 %v562, %v639
        %v667 = vmul.f32 %v563, %v639
        %v668 = vmul.f32 %v564, %v639
        %v669 = vmul.f32 %v565, %v639
        %v670 = vmul.f32 %v566, %v639
        %v671 = vmul.f32 %v567, %v639
        %v672 = vlaneseq
        %v673 = vshrl.u32 %v672, 7
        %v674 = vsub.s32 0, %v673
        %v675 = vrot.slane %v495, %v674
        %v676 = vmul.f32 %v640, %v675
        %v677 = vmul.f32 %v641, %v675
        %v678 = vmul.f32 %v642, %v675
        %v679 = vmul.f32 %v643, %v675
        %v680 = vmul.f32 %v644, %v675
        %v681 = vmul.f32 %v645, %v675
        %v682 = vmul.f32 %v646, %v675
        %v683 = vmul.f32 %v647, %v675
        %v684 = vmul.f32 %v648, %v675
        %v685 = vmul.f32 %v649, %v675
        %v686 = vmul.f32 %v650, %v675
        %v687 = vmul.f32 %v651, %v675
        %v688 = vmul.f32 %v652, %v675
        %v689 = vmul.f32 %v653, %v675
        %v690 = vmul.f32 %v654, %v675
        %v691 = vmul.f32 %v655, %v675
        %v692 = vmul.f32 %v656, %v675
        %v693 = vmul.f32 %v657, %v675
        %v694 = vmul.f32 %v658, %v675
        %v695 = vmul.f32 %v659, %v675
        %v696 = vmul.f32 %v660, %v675
        %v697 = vmul.f32 %v661, %v675
        %v698 = vmul.f32 %v662, %v675
        %v699 = vmul.f32 %v663, %v675
        %v700 = vmul.f32 %v664, %v675
        %v701 = vmul.f32 %v665, %v675
        %v702 = vmul.f32 %v666, %v675
        %v703 = vmul.f32 %v667, %v675
        %v704 = vmul.f32 %v668, %v675
        %v705 = vmul.f32 %v669, %v675
        %v706 = vmul.f32 %v670, %v675
        %v707 = vmul.f32 %v671, %v675
        %v708 = vlaneseq
        %v709 = vshrl.u32 %v708, 7
        %v710 = vsub.s32 0, %v709
        %v711 = vrot.slane %v496, %v710
        %v712 = vadd.f32 %v676, %v711
        %v713 = vadd.f32 %v677, %v711
        %v714 = vadd.f32 %v678, %v711
        %v715 = vadd.f32 %v679, %v711
        %v716 = vadd.f32 %v680, %v711
        %v717 = vadd.f32 %v681, %v711
        %v718 = vadd.f32 %v682, %v711
        %v719 = vadd.f32 %v683, %v711
        %v720 = vadd.f32 %v684, %v711
        %v721 = vadd.f32 %v685, %v711
        %v722 = vadd.f32 %v686, %v711
        %v723 = vadd.f32 %v687, %v711
        %v724 = vadd.f32 %v688, %v711
        %v725 = vadd.f32 %v689, %v711
        %v726 = vadd.f32 %v690, %v711
        %v727 = vadd.f32 %v691, %v711
        %v728 = vadd.f32 %v692, %v711
        %v729 = vadd.f32 %v693, %v711
        %v730 = vadd.f32 %v694, %v711
        %v731 = vadd.f32 %v695, %v711
        %v732 = vadd.f32 %v696, %v711
        %v733 = vadd.f32 %v697, %v711
        %v734 = vadd.f32 %v698, %v711
        %v735 = vadd.f32 %v699, %v711
        %v736 = vadd.f32 %v700, %v711
        %v737 = vadd.f32 %v701, %v711
        %v738 = vadd.f32 %v702, %v711
        %v739 = vadd.f32 %v703, %v711
        %v740 = vadd.f32 %v704, %v711
        %v741 = vadd.f32 %v705, %v711
        %v742 = vadd.f32 %v706, %v711
        %v743 = vadd.f32 %v707, %v711
        %744 = vst [vmem:[%s215] sm:$0xff] %v712
        %745 = vst [vmem:[%s215 + $0x8] sm:$0xff] %v713
        %746 = vst [vmem:[%s215 + $0x10] sm:$0xff] %v714
        %747 = vst [vmem:[%s215 + $0x18] sm:$0xff] %v715
        %748 = vst [vmem:[%s215 + $0x20] sm:$0xff] %v716
        %749 = vst [vmem:[%s215 + $0x28] sm:$0xff] %v717
        %750 = vst [vmem:[%s215 + $0x30] sm:$0xff] %v718
        %751 = vst [vmem:[%s215 + $0x38] sm:$0xff] %v719
        %752 = vst [vmem:[%s215 + $0x40] sm:$0xff] %v720
        %753 = vst [vmem:[%s215 + $0x48] sm:$0xff] %v721
        %754 = vst [vmem:[%s215 + $0x50] sm:$0xff] %v722
        %755 = vst [vmem:[%s215 + $0x58] sm:$0xff] %v723
        %756 = vst [vmem:[%s215 + $0x60] sm:$0xff] %v724
        %757 = vst [vmem:[%s215 + $0x68] sm:$0xff] %v725
        %758 = vst [vmem:[%s215 + $0x70] sm:$0xff] %v726
        %759 = vst [vmem:[%s215 + $0x78] sm:$0xff] %v727
        %760 = vst [vmem:[%s215 + $0x80] sm:$0xff] %v728
        %761 = vst [vmem:[%s215 + $0x88] sm:$0xff] %v729
        %762 = vst [vmem:[%s215 + $0x90] sm:$0xff] %v730
        %763 = vst [vmem:[%s215 + $0x98] sm:$0xff] %v731
        %764 = vst [vmem:[%s215 + $0xa0] sm:$0xff] %v732
        %765 = vst [vmem:[%s215 + $0xa8] sm:$0xff] %v733
        %766 = vst [vmem:[%s215 + $0xb0] sm:$0xff] %v734
        %767 = vst [vmem:[%s215 + $0xb8] sm:$0xff] %v735
        %768 = vst [vmem:[%s215 + $0xc0] sm:$0xff] %v736
        %769 = vst [vmem:[%s215 + $0xc8] sm:$0xff] %v737
        %770 = vst [vmem:[%s215 + $0xd0] sm:$0xff] %v738
        %771 = vst [vmem:[%s215 + $0xd8] sm:$0xff] %v739
        %772 = vst [vmem:[%s215 + $0xe0] sm:$0xff] %v740
        %773 = vst [vmem:[%s215 + $0xe8] sm:$0xff] %v741
        %774 = vst [vmem:[%s215 + $0xf0] sm:$0xff] %v742
        %775 = vst [vmem:[%s215 + $0xf8] sm:$0xff] %v743
        %s776 = sand.u32 %s97, 1
        %s777 = scalar_lea.sflag [#allocation4], %s776
        %s778 = sand.u32 %s97, 1
        %s779 = smul.addr %s778, 256
        %s780 = scalar_lea.vmem [#allocation8], %s779
        // Predicated region
        $region45: #{tpu_custom_call.1} parent=31 // pred_check
          %p781 = pneg %p107
        $region46: #{tpu_custom_call.1} parent=31 // pred_check_branch
          %783 = sbr.rel (%p781) target = $region48
        $region47: #{tpu_custom_call.1} parent=31 // pred_region
          %s785 = ssub.s32 4096, 4096
          %786 = vsyncadd %s777, %s785
          %s787 = smul.addr %s21, 32
          %s788 = smul.addr %s787, 128
          %s789 = scalar_lea.hbm %s3, %s788
          %s790 = sshll.u32 %s780, 4
          %s791 = int_to_ptr.vmem [resolvable:$true] %s790
          %796 = dma.vmem_to_hbm [thread:$0]  %s791, 4096, %s789, %s777, 128, 128, 8
        $region48: #{tpu_custom_call.1} parent=31 // pred_fallthru
          _
      $region32: #{tpu_custom_call.1} parent=5 // pred_fallthru
        _
      %p797 = scmp.le.s32.totalorder 2, %s16
      // Predicated region
      $region49: #{tpu_custom_call.1} parent=5 // pred_check
        %p798 = pneg %p797
      $region50: #{tpu_custom_call.1} parent=5 // pred_check_branch
        %800 = sbr.rel (%p798) target = $region52
      $region51: #{tpu_custom_call.1} parent=5 // pred_region
        %s801 = ssub.s32 %s16, 2
        // Predicated region
        $region53: #{tpu_custom_call.1} parent=51 // pred_check
          %p802 = pneg %p113
        $region54: #{tpu_custom_call.1} parent=51 // pred_check_branch
          %804 = sbr.rel (%p802) target = $region56
        $region55: #{tpu_custom_call.1} parent=51 // pred_region
          %s805 = sand.u32 %s98, 1
          %s806 = scalar_lea.sflag [#allocation4], %s805
          %s807 = sand.u32 %s98, 1
          %s808 = smul.addr %s807, 256
          %s809 = scalar_lea.vmem [#allocation8], %s808
          %810 = dma.done %s806, 4096
        $region56: #{tpu_custom_call.1} parent=51 // pred_fallthru
          _
      $region52: #{tpu_custom_call.1} parent=5 // pred_fallthru
        _
    $region6: #{tpu_custom_call.1} parent=1 // loop_footer
      %s20 = sadd.s32 1, %s16
    $region7: #{tpu_custom_call.1} parent=1 // loop_footer_branch
      %15 = sbr.rel target = $region3
    $region8: #{tpu_custom_call.1} parent=1 // loop_exit
      _
    %811 = vsyncpa [#allocation3], 1
    %s812 = scalar_lea.sflag [#allocation3], 1
    %813 = vsyncpa %s812, 1
    %814 = vsyncpa [#allocation6], 1
    %815 = vsyncpa [#allocation4], 1
    %s816 = scalar_lea.sflag [#allocation4], 1
    %817 = vsyncpa %s816, 1

</llo_original>
